<compile_context>
chip_gen: v5e
topology: v5e:2x2
jax: 0.10.0
libtpu: 0.0.40
codegen_flags: <defaults>
</compile_context>

<pallas_src>
import functools

import jax
import jax.numpy as jnp
from jax import lax
from jax.experimental import pallas as pl
from jax.experimental.pallas import tpu as pltpu

_LANE = 128


def _round_up(x, m):
    return (x + m - 1) // m * m


def _kd_kernel(x_ref, loss_l_ref, loss_c_ref, npos_ref,
               acc_l, acc_c, acc_n, *, num_classes, chunk):
    """One grid step over a (F, g_tile, 128) slab of per-prior feature planes.

    Feature-plane layout (leading axis of x_ref):
      0 pos | 1 neg | 2 b0_s | 3 b1_s | 4 b0_t | 5 b1_t
      6-9 loc_s | 10-13 loc_t | 14..13+C conf_s | 14+C..13+2C conf_t
    """
    C = num_classes
    tiles = pl.num_programs(1)
    g_tile = x_ref.shape[1]
    n_chunks = g_tile // chunk          # static python int

    # Reset the per-shard VMEM accumulators at the start of each shard's sweep.
    @pl.when(pl.program_id(1) == 0)
    def _():
        acc_l[...] = jnp.zeros_like(acc_l)
        acc_c[...] = jnp.zeros_like(acc_c)
        acc_n[...] = jnp.zeros_like(acc_n)

    def body(j, carry):
        r = pl.multiple_of(j * chunk, chunk)

        def plane(idx):
            # (chunk, 128) feature sub-plane; cast in-register (slab may be bf16).
            return x_ref[idx, pl.ds(r, chunk), :].astype(jnp.float32)

        pos = plane(0)
        neg = plane(1)
        b0_s, b1_s = plane(2), plane(3)
        b0_t, b1_t = plane(4), plane(5)

        # ---- localization KD term: sum over positive priors of ||loc_s-loc_t||^2
        loc_sq = None
        for d in range(4):
            diff = plane(6 + d) - plane(10 + d)
            loc_sq = diff * diff if loc_sq is None else loc_sq + diff * diff
        acc_l[...] = acc_l[...] + pos * loc_sq

        # ---- number of positives (folded into the kernel; no second HBM pass)
        acc_n[...] = acc_n[...] + pos

        # ---- decomposed-softmax ("binary-gated") logits ----------------------
        conf_s = [plane(14 + k) for k in range(C)]
        conf_t = [plane(14 + C + k) for k in range(C)]

        def p_logit(conf, b0, b1):
            # Stabilized but mathematically identical to
            #   P_0 = log(exp(b0) * sum_c exp(conf_c) + exp(b1 + conf_0))
            #   P_k = conf_k + b1,  k = 1..C-1
            m0 = conf[0]
            for k in range(1, C):
                m0 = jnp.maximum(m0, conf[k])
            se = jnp.exp(conf[0] - m0)
            for k in range(1, C):
                se = se + jnp.exp(conf[k] - m0)
            a = b0 + m0
            b = b1 + conf[0]                  # direct read of class-0 logit
            mm = jnp.maximum(a, b)
            p0 = mm + jnp.log(jnp.exp(a - mm) * se + jnp.exp(b - mm))
            return [p0] + [conf[k] + b1 for k in range(1, C)]

        P_s = p_logit(conf_s, b0_s, b1_s)
        P_t = p_logit(conf_t, b0_t, b1_t)

        # ---- TK_regularization: temperature-2 soft cross-entropy, log-space --
        #   row_ce = logsumexp(q) - sum_c softmax(p)_c * q_c
        inv_tao = 0.5
        p = [v * inv_tao for v in P_s]
        q = [v * inv_tao for v in P_t]

        max_p, max_q = p[0], q[0]
        for k in range(1, C):
            max_p = jnp.maximum(max_p, p[k])
            max_q = jnp.maximum(max_q, q[k])

        sum_ep = sum_eq = pq = None
        for k in range(C):
            ep = jnp.exp(p[k] - max_p)
            eq = jnp.exp(q[k] - max_q)
            t = ep * q[k]
            sum_ep = ep if sum_ep is None else sum_ep + ep
            sum_eq = eq if sum_eq is None else sum_eq + eq
            pq = t if pq is None else pq + t

        inv_ep = pl.reciprocal(sum_ep, approx=True)   # EUP slot, nearly free
        inv_ep = inv_ep * (2.0 - sum_ep * inv_ep)     # one Newton step -> f32
        lse_q = max_q + jnp.log(sum_eq)
        row_ce = lse_q - pq * inv_ep                  # (chunk, 128)

        sel = jnp.where(pos + neg > 0.0, 1.0, 0.0)
        acc_c[...] = acc_c[...] + sel * row_ce
        return carry

    unroll = True if n_chunks <= 8 else 2
    lax.fori_loop(0, n_chunks, body, 0, unroll=unroll)

    # Single cross-lane/cross-sublane reduction per shard, on the last step.
    @pl.when(pl.program_id(1) == tiles - 1)
    def _():
        loss_l_ref[...] = jnp.sum(acc_l[...], axis=(0, 1), keepdims=True)
        loss_c_ref[...] = jnp.sum(acc_c[...], axis=(0, 1), keepdims=True)
        npos_ref[...] = jnp.sum(acc_n[...], axis=(0, 1), keepdims=True)


def kd_loss_pallas(loc_s, conf_s, bin_s, loc_t, conf_t, bin_t, pos, neg,
                   rows_per_tile=32768, num_shards=1, use_bf16_slab=True,
                   core_parallel=False):
    """Returns (kd_loss_l, kd_loss_c) exactly as KD_loss.forward."""
    B, P, C = conf_s.shape
    N = B * P

    slab_dtype = jnp.bfloat16 if use_bf16_slab else jnp.float32
    sub = 16 if use_bf16_slab else 8          # native sublane tiling
    chunk = sub                               # compute-chunk rows per fori step
    ebytes = 2 if use_bf16_slab else 4

    unit = sub * _LANE                        # minimal prior tile
    rows_per_tile = max(unit, min(_round_up(rows_per_tile, unit),
                                  _round_up(N, unit)))
    g_tile = rows_per_tile // _LANE           # multiple of `chunk`
    n_pad = _round_up(N, rows_per_tile * num_shards)

    # Feature-major slab built directly as (F, N_pad): each piece is a small
    # (k, N_pad) transposed-and-padded slice, one concat writes the final slab.
    # zero padding => pos = neg = 0 there, padded priors drop out of all terms.
    # TODO(synk): in a real pipeline this feature-major slab should be emitted
    # directly by the SSD heads to avoid this transpose pass over HBM.
    def piece(x, k):
        t = x.reshape(N, k).astype(slab_dtype).T          # (k, N)
        if n_pad != N:
            t = jnp.pad(t, ((0, 0), (0, n_pad - N)))
        return t

    F = 14 + 2 * C
    slab = jnp.concatenate([
        piece(pos, 1), piece(neg, 1),
        piece(bin_s, 2), piece(bin_t, 2),
        piece(loc_s, 4), piece(loc_t, 4),
        piece(conf_s, C), piece(conf_t, C),
    ], axis=0).reshape(F, n_pad // _LANE, _LANE)           # (F, G, 128)

    g_total = n_pad // _LANE
    tiles_per_shard = g_total // (g_tile * num_shards)

    grid = (num_shards, tiles_per_shard)
    in_spec = pl.BlockSpec(
        (F, g_tile, _LANE),
        lambda c, i: (0, c * tiles_per_shard + i, 0))
    out_spec = pl.BlockSpec((None, 1, 1), lambda c, i: (c, 0, 0))
    acc = jax.ShapeDtypeStruct((num_shards, 1, 1), jnp.float32)

    if core_parallel:
        # v7x: real 2-TensorCore split of the leading (shard) axis.
        dims = (pltpu.CORE_PARALLEL, pltpu.ARBITRARY)
    else:
        dims = ("parallel", "arbitrary")

    cost = pl.CostEstimate(
        flops=int((30 + 20 * C) * n_pad),
        transcendentals=int((4 * C + 8) * n_pad),
        bytes_accessed=int(F * n_pad * ebytes + 3 * num_shards * 4),
    )

    loss_l, loss_c, npos = pl.pallas_call(
        functools.partial(_kd_kernel, num_classes=C, chunk=chunk),
        out_shape=(acc, acc, acc),
        grid_spec=pltpu.PrefetchScalarGridSpec(
            num_scalar_prefetch=0,
            grid=grid,
            in_specs=[in_spec],
            out_specs=[out_spec, out_spec, out_spec],
            scratch_shapes=[pltpu.VMEM((chunk, _LANE), jnp.float32),
                            pltpu.VMEM((chunk, _LANE), jnp.float32),
                            pltpu.VMEM((chunk, _LANE), jnp.float32)],
        ),
        compiler_params=pltpu.CompilerParams(dimension_semantics=dims),
        cost_estimate=cost,
    )(slab)

    n_pos = jnp.maximum(jnp.sum(npos), 1.0)
    return jnp.sum(loss_l) / n_pos, jnp.sum(loss_c) / n_pos


def kd_loss_ref(loc_s, conf_s, bin_s, loc_t, conf_t, bin_t, pos, neg):
    """Pure-JAX reference (direct transcription of the PyTorch forward)."""
    B, P, C = conf_s.shape
    posf = pos.astype(jnp.float32)
    diff = loc_s - loc_t
    kd_l = jnp.sum(posf[..., None] * diff ** 2)

    def p_logit(conf, binc):
        cf = conf.reshape(-1, C)
        bc = binc.reshape(-1, 2)
        Pk = cf[:, 1:] + bc[:, 1:2]
        P0 = jnp.log(jnp.exp(bc[:, 0:1]) * jnp.sum(jnp.exp(cf), axis=1, keepdims=True)
                     + jnp.exp(bc[:, 1:2] + cf[:, 0:1]))
        return jnp.concatenate([P0, Pk], axis=1)

    Ps = p_logit(conf_s, bin_s)
    Pt = p_logit(conf_t, bin_t)
    sel = ((pos.astype(jnp.int32) + neg.astype(jnp.int32)) > 0
           ).reshape(-1, 1).astype(jnp.float32)
    p = Ps / 2.0
    q = Pt / 2.0
    p = p - jnp.max(p, axis=1, keepdims=True)
    q = q - jnp.max(q, axis=1, keepdims=True)
    pp = jnp.exp(p) / jnp.sum(jnp.exp(p), axis=1, keepdims=True)
    qp = jnp.exp(q) / jnp.sum(jnp.exp(q), axis=1, keepdims=True)
    kd_c = jnp.sum(sel * (-pp * jnp.log(qp)))
    n_pos = jnp.maximum(jnp.sum(posf), 1.0)
    return kd_l / n_pos, kd_c / n_pos


if __name__ == "__main__":
    # Module "hyper-parameters" (this loss has no learnable weights):
    num_classes = 4
    B, P = 2, 16          # batch, num_priors  (B*P = 32 priors)

    key = jax.random.PRNGKey(0)
    ks = jax.random.split(key, 9)
    loc_s = 0.5 * jax.random.normal(ks[0], (B, P, 4), jnp.float32)
    loc_t = 0.5 * jax.random.normal(ks[1], (B, P, 4), jnp.float32)
    conf_s = 0.5 * jax.random.normal(ks[2], (B, P, num_classes), jnp.float32)
    conf_t = 0.5 * jax.random.normal(ks[3], (B, P, num_classes), jnp.float32)
    bin_s = 0.5 * jax.random.normal(ks[4], (B, P, 2), jnp.float32)
    bin_t = 0.5 * jax.random.normal(ks[5], (B, P, 2), jnp.float32)
    pos = jax.random.bernoulli(ks[6], 0.3, (B, P))
    neg = jnp.logical_and(jax.random.bernoulli(ks[7], 0.4, (B, P)),
                          jnp.logical_not(pos))

    ref_l, ref_c = kd_loss_ref(loc_s, conf_s, bin_s, loc_t, conf_t, bin_t, pos, neg)

    # Default path: bf16-streamed slab (memory-bound chips) — bf16 logit
    # rounding carries a few 1e-3 relative error, so compare at 1e-2.
    kd_fn = jax.jit(kd_loss_pallas)
    kd_l, kd_c = kd_fn(loc_s, conf_s, bin_s, loc_t, conf_t, bin_t, pos, neg)
    kd_l = jax.block_until_ready(kd_l)
    kd_c = jax.block_until_ready(kd_c)
    assert jnp.allclose(kd_l, ref_l, rtol=1e-2, atol=1e-2), (kd_l, ref_l)
    assert jnp.allclose(kd_c, ref_c, rtol=1e-2, atol=1e-2), (kd_c, ref_c)

    # f32-slab path for tight numerics validation of the kernel math.
    kd_fn32 = jax.jit(functools.partial(kd_loss_pallas, use_bf16_slab=False))
    kd_l32, kd_c32 = kd_fn32(loc_s, conf_s, bin_s, loc_t, conf_t, bin_t, pos, neg)
    kd_l32 = jax.block_until_ready(kd_l32)
    kd_c32 = jax.block_until_ready(kd_c32)
    assert jnp.allclose(kd_l32, ref_l, rtol=1e-3, atol=1e-3), (kd_l32, ref_l)
    assert jnp.allclose(kd_c32, ref_c, rtol=1e-3, atol=1e-3), (kd_c32, ref_c)

    print("KERNEL_OK")
</pallas_src>

<mosaic_0001>
module attributes {stable_mosaic.version = 11 : i64} {
  func.func @_kd_kernel(%arg0: i32, %arg1: i32, %arg2: memref<22x16x128xbf16, #tpu.memory_space<vmem>>, %arg3: memref<1x1x1xf32, #tpu.memory_space<vmem>>, %arg4: memref<1x1x1xf32, #tpu.memory_space<vmem>>, %arg5: memref<1x1x1xf32, #tpu.memory_space<vmem>>, %arg6: memref<16x128xf32, #tpu.memory_space<vmem>>, %arg7: memref<16x128xf32, #tpu.memory_space<vmem>>, %arg8: memref<16x128xf32, #tpu.memory_space<vmem>>) attributes {dimension_semantics = [#tpu.dimension_semantics<parallel>, #tpu.dimension_semantics<arbitrary>], iteration_bounds = array<i64: 1, 1>, scalar_prefetch = 0 : i64, scratch_operands = 3 : i64, tpu.core_type = #tpu.core_type<tc>, window_params = [{transform_indices = @transform_0, window_bounds = array<i64: 22, 16, 128>}, {transform_indices = @transform_1, window_bounds = array<i64: 1, 1, 1>}, {transform_indices = @transform_2, window_bounds = array<i64: 1, 1, 1>}, {transform_indices = @transform_3, window_bounds = array<i64: 1, 1, 1>}]} {
    %c0_i32 = arith.constant 0 : i32
    %0 = arith.cmpi eq, %arg1, %c0_i32 : i32
    %1 = arith.extui %0 : i1 to i32
    %c0_i32_0 = arith.constant 0 : i32
    %2 = arith.cmpi ne, %1, %c0_i32_0 : i32
    scf.if %2 {
      %cst_49 = arith.constant 0.000000e+00 : f32
      %240 = vector.broadcast %cst_49 : f32 to vector<16x128xf32>
      %c0_50 = arith.constant 0 : index
      %c0_51 = arith.constant 0 : index
      %241 = vector.load %arg6[%c0_50, %c0_51] : memref<16x128xf32, #tpu.memory_space<vmem>>, vector<16x128xf32>
      tpu.vector_store %arg6[%c0_50, %c0_51], %240 {strides = array<i32>} : memref<16x128xf32, #tpu.memory_space<vmem>>, vector<16x128xf32>,
      %cst_52 = arith.constant 0.000000e+00 : f32
      %242 = vector.broadcast %cst_52 : f32 to vector<16x128xf32>
      %c0_53 = arith.constant 0 : index
      %c0_54 = arith.constant 0 : index
      %243 = vector.load %arg7[%c0_53, %c0_54] : memref<16x128xf32, #tpu.memory_space<vmem>>, vector<16x128xf32>
      tpu.vector_store %arg7[%c0_53, %c0_54], %242 {strides = array<i32>} : memref<16x128xf32, #tpu.memory_space<vmem>>, vector<16x128xf32>,
      %cst_55 = arith.constant 0.000000e+00 : f32
      %244 = vector.broadcast %cst_55 : f32 to vector<16x128xf32>
      %c0_56 = arith.constant 0 : index
      %c0_57 = arith.constant 0 : index
      %245 = vector.load %arg8[%c0_56, %c0_57] : memref<16x128xf32, #tpu.memory_space<vmem>>, vector<16x128xf32>
      tpu.vector_store %arg8[%c0_56, %c0_57], %244 {strides = array<i32>} : memref<16x128xf32, #tpu.memory_space<vmem>>, vector<16x128xf32>,
    } else {
    }
    %c0_i32_1 = arith.constant 0 : i32
    %c16_i32 = arith.constant 16 : i32
    %3 = arith.muli %c0_i32_1, %c16_i32 : i32
    %4 = tpu.assume_multiple %3, 16 : i32
    %c0 = arith.constant 0 : index
    %5 = arith.index_cast %4 : i32 to index
    %c0_2 = arith.constant 0 : index
    %6 = vector.load %arg2[%c0, %5, %c0_2] : memref<22x16x128xbf16, #tpu.memory_space<vmem>>, vector<1x16x128xbf16>
    %7 = vector.shape_cast %6 : vector<1x16x128xbf16> to vector<16x128xbf16>
    %8 = arith.extf %7 : vector<16x128xbf16> to vector<16x128xf32>
    %c1 = arith.constant 1 : index
    %9 = arith.index_cast %4 : i32 to index
    %c0_3 = arith.constant 0 : index
    %10 = vector.load %arg2[%c1, %9, %c0_3] : memref<22x16x128xbf16, #tpu.memory_space<vmem>>, vector<1x16x128xbf16>
    %11 = vector.shape_cast %10 : vector<1x16x128xbf16> to vector<16x128xbf16>
    %12 = arith.extf %11 : vector<16x128xbf16> to vector<16x128xf32>
    %c2 = arith.constant 2 : index
    %13 = arith.index_cast %4 : i32 to index
    %c0_4 = arith.constant 0 : index
    %14 = vector.load %arg2[%c2, %13, %c0_4] : memref<22x16x128xbf16, #tpu.memory_space<vmem>>, vector<1x16x128xbf16>
    %15 = vector.shape_cast %14 : vector<1x16x128xbf16> to vector<16x128xbf16>
    %16 = arith.extf %15 : vector<16x128xbf16> to vector<16x128xf32>
    %c3 = arith.constant 3 : index
    %17 = arith.index_cast %4 : i32 to index
    %c0_5 = arith.constant 0 : index
    %18 = vector.load %arg2[%c3, %17, %c0_5] : memref<22x16x128xbf16, #tpu.memory_space<vmem>>, vector<1x16x128xbf16>
    %19 = vector.shape_cast %18 : vector<1x16x128xbf16> to vector<16x128xbf16>
    %20 = arith.extf %19 : vector<16x128xbf16> to vector<16x128xf32>
    %c4 = arith.constant 4 : index
    %21 = arith.index_cast %4 : i32 to index
    %c0_6 = arith.constant 0 : index
    %22 = vector.load %arg2[%c4, %21, %c0_6] : memref<22x16x128xbf16, #tpu.memory_space<vmem>>, vector<1x16x128xbf16>
    %23 = vector.shape_cast %22 : vector<1x16x128xbf16> to vector<16x128xbf16>
    %24 = arith.extf %23 : vector<16x128xbf16> to vector<16x128xf32>
    %c5 = arith.constant 5 : index
    %25 = arith.index_cast %4 : i32 to index
    %c0_7 = arith.constant 0 : index
    %26 = vector.load %arg2[%c5, %25, %c0_7] : memref<22x16x128xbf16, #tpu.memory_space<vmem>>, vector<1x16x128xbf16>
    %27 = vector.shape_cast %26 : vector<1x16x128xbf16> to vector<16x128xbf16>
    %28 = arith.extf %27 : vector<16x128xbf16> to vector<16x128xf32>
    %c6 = arith.constant 6 : index
    %29 = arith.index_cast %4 : i32 to index
    %c0_8 = arith.constant 0 : index
    %30 = vector.load %arg2[%c6, %29, %c0_8] : memref<22x16x128xbf16, #tpu.memory_space<vmem>>, vector<1x16x128xbf16>
    %31 = vector.shape_cast %30 : vector<1x16x128xbf16> to vector<16x128xbf16>
    %32 = arith.extf %31 : vector<16x128xbf16> to vector<16x128xf32>
    %c10 = arith.constant 10 : index
    %33 = arith.index_cast %4 : i32 to index
    %c0_9 = arith.constant 0 : index
    %34 = vector.load %arg2[%c10, %33, %c0_9] : memref<22x16x128xbf16, #tpu.memory_space<vmem>>, vector<1x16x128xbf16>
    %35 = vector.shape_cast %34 : vector<1x16x128xbf16> to vector<16x128xbf16>
    %36 = arith.extf %35 : vector<16x128xbf16> to vector<16x128xf32>
    %37 = arith.subf %32, %36 : vector<16x128xf32>
    %38 = arith.mulf %37, %37 : vector<16x128xf32>
    %c7 = arith.constant 7 : index
    %39 = arith.index_cast %4 : i32 to index
    %c0_10 = arith.constant 0 : index
    %40 = vector.load %arg2[%c7, %39, %c0_10] : memref<22x16x128xbf16, #tpu.memory_space<vmem>>, vector<1x16x128xbf16>
    %41 = vector.shape_cast %40 : vector<1x16x128xbf16> to vector<16x128xbf16>
    %42 = arith.extf %41 : vector<16x128xbf16> to vector<16x128xf32>
    %c11 = arith.constant 11 : index
    %43 = arith.index_cast %4 : i32 to index
    %c0_11 = arith.constant 0 : index
    %44 = vector.load %arg2[%c11, %43, %c0_11] : memref<22x16x128xbf16, #tpu.memory_space<vmem>>, vector<1x16x128xbf16>
    %45 = vector.shape_cast %44 : vector<1x16x128xbf16> to vector<16x128xbf16>
    %46 = arith.extf %45 : vector<16x128xbf16> to vector<16x128xf32>
    %47 = arith.subf %42, %46 : vector<16x128xf32>
    %48 = arith.mulf %47, %47 : vector<16x128xf32>
    %49 = arith.addf %38, %48 : vector<16x128xf32>
    %c8 = arith.constant 8 : index
    %50 = arith.index_cast %4 : i32 to index
    %c0_12 = arith.constant 0 : index
    %51 = vector.load %arg2[%c8, %50, %c0_12] : memref<22x16x128xbf16, #tpu.memory_space<vmem>>, vector<1x16x128xbf16>
    %52 = vector.shape_cast %51 : vector<1x16x128xbf16> to vector<16x128xbf16>
    %53 = arith.extf %52 : vector<16x128xbf16> to vector<16x128xf32>
    %c12 = arith.constant 12 : index
    %54 = arith.index_cast %4 : i32 to index
    %c0_13 = arith.constant 0 : index
    %55 = vector.load %arg2[%c12, %54, %c0_13] : memref<22x16x128xbf16, #tpu.memory_space<vmem>>, vector<1x16x128xbf16>
    %56 = vector.shape_cast %55 : vector<1x16x128xbf16> to vector<16x128xbf16>
    %57 = arith.extf %56 : vector<16x128xbf16> to vector<16x128xf32>
    %58 = arith.subf %53, %57 : vector<16x128xf32>
    %59 = arith.mulf %58, %58 : vector<16x128xf32>
    %60 = arith.addf %49, %59 : vector<16x128xf32>
    %c9 = arith.constant 9 : index
    %61 = arith.index_cast %4 : i32 to index
    %c0_14 = arith.constant 0 : index
    %62 = vector.load %arg2[%c9, %61, %c0_14] : memref<22x16x128xbf16, #tpu.memory_space<vmem>>, vector<1x16x128xbf16>
    %63 = vector.shape_cast %62 : vector<1x16x128xbf16> to vector<16x128xbf16>
    %64 = arith.extf %63 : vector<16x128xbf16> to vector<16x128xf32>
    %c13 = arith.constant 13 : index
    %65 = arith.index_cast %4 : i32 to index
    %c0_15 = arith.constant 0 : index
    %66 = vector.load %arg2[%c13, %65, %c0_15] : memref<22x16x128xbf16, #tpu.memory_space<vmem>>, vector<1x16x128xbf16>
    %67 = vector.shape_cast %66 : vector<1x16x128xbf16> to vector<16x128xbf16>
    %68 = arith.extf %67 : vector<16x128xbf16> to vector<16x128xf32>
    %69 = arith.subf %64, %68 : vector<16x128xf32>
    %70 = arith.mulf %69, %69 : vector<16x128xf32>
    %71 = arith.addf %60, %70 : vector<16x128xf32>
    %c0_16 = arith.constant 0 : index
    %c0_17 = arith.constant 0 : index
    %72 = vector.load %arg6[%c0_16, %c0_17] : memref<16x128xf32, #tpu.memory_space<vmem>>, vector<16x128xf32>
    %73 = arith.mulf %8, %71 : vector<16x128xf32>
    %74 = arith.addf %72, %73 : vector<16x128xf32>
    %c0_18 = arith.constant 0 : index
    %c0_19 = arith.constant 0 : index
    %75 = vector.load %arg6[%c0_18, %c0_19] : memref<16x128xf32, #tpu.memory_space<vmem>>, vector<16x128xf32>
    tpu.vector_store %arg6[%c0_18, %c0_19], %74 {strides = array<i32>} : memref<16x128xf32, #tpu.memory_space<vmem>>, vector<16x128xf32>,
    %c0_20 = arith.constant 0 : index
    %c0_21 = arith.constant 0 : index
    %76 = vector.load %arg8[%c0_20, %c0_21] : memref<16x128xf32, #tpu.memory_space<vmem>>, vector<16x128xf32>
    %77 = arith.addf %76, %8 : vector<16x128xf32>
    %c0_22 = arith.constant 0 : index
    %c0_23 = arith.constant 0 : index
    %78 = vector.load %arg8[%c0_22, %c0_23] : memref<16x128xf32, #tpu.memory_space<vmem>>, vector<16x128xf32>
    tpu.vector_store %arg8[%c0_22, %c0_23], %77 {strides = array<i32>} : memref<16x128xf32, #tpu.memory_space<vmem>>, vector<16x128xf32>,
    %c14 = arith.constant 14 : index
    %79 = arith.index_cast %4 : i32 to index
    %c0_24 = arith.constant 0 : index
    %80 = vector.load %arg2[%c14, %79, %c0_24] : memref<22x16x128xbf16, #tpu.memory_space<vmem>>, vector<1x16x128xbf16>
    %81 = vector.shape_cast %80 : vector<1x16x128xbf16> to vector<16x128xbf16>
    %82 = arith.extf %81 : vector<16x128xbf16> to vector<16x128xf32>
    %c15 = arith.constant 15 : index
    %83 = arith.index_cast %4 : i32 to index
    %c0_25 = arith.constant 0 : index
    %84 = vector.load %arg2[%c15, %83, %c0_25] : memref<22x16x128xbf16, #tpu.memory_space<vmem>>, vector<1x16x128xbf16>
    %85 = vector.shape_cast %84 : vector<1x16x128xbf16> to vector<16x128xbf16>
    %86 = arith.extf %85 : vector<16x128xbf16> to vector<16x128xf32>
    %c16 = arith.constant 16 : index
    %87 = arith.index_cast %4 : i32 to index
    %c0_26 = arith.constant 0 : index
    %88 = vector.load %arg2[%c16, %87, %c0_26] : memref<22x16x128xbf16, #tpu.memory_space<vmem>>, vector<1x16x128xbf16>
    %89 = vector.shape_cast %88 : vector<1x16x128xbf16> to vector<16x128xbf16>
    %90 = arith.extf %89 : vector<16x128xbf16> to vector<16x128xf32>
    %c17 = arith.constant 17 : index
    %91 = arith.index_cast %4 : i32 to index
    %c0_27 = arith.constant 0 : index
    %92 = vector.load %arg2[%c17, %91, %c0_27] : memref<22x16x128xbf16, #tpu.memory_space<vmem>>, vector<1x16x128xbf16>
    %93 = vector.shape_cast %92 : vector<1x16x128xbf16> to vector<16x128xbf16>
    %94 = arith.extf %93 : vector<16x128xbf16> to vector<16x128xf32>
    %c18 = arith.constant 18 : index
    %95 = arith.index_cast %4 : i32 to index
    %c0_28 = arith.constant 0 : index
    %96 = vector.load %arg2[%c18, %95, %c0_28] : memref<22x16x128xbf16, #tpu.memory_space<vmem>>, vector<1x16x128xbf16>
    %97 = vector.shape_cast %96 : vector<1x16x128xbf16> to vector<16x128xbf16>
    %98 = arith.extf %97 : vector<16x128xbf16> to vector<16x128xf32>
    %c19 = arith.constant 19 : index
    %99 = arith.index_cast %4 : i32 to index
    %c0_29 = arith.constant 0 : index
    %100 = vector.load %arg2[%c19, %99, %c0_29] : memref<22x16x128xbf16, #tpu.memory_space<vmem>>, vector<1x16x128xbf16>
    %101 = vector.shape_cast %100 : vector<1x16x128xbf16> to vector<16x128xbf16>
    %102 = arith.extf %101 : vector<16x128xbf16> to vector<16x128xf32>
    %c20 = arith.constant 20 : index
    %103 = arith.index_cast %4 : i32 to index
    %c0_30 = arith.constant 0 : index
    %104 = vector.load %arg2[%c20, %103, %c0_30] : memref<22x16x128xbf16, #tpu.memory_space<vmem>>, vector<1x16x128xbf16>
    %105 = vector.shape_cast %104 : vector<1x16x128xbf16> to vector<16x128xbf16>
    %106 = arith.extf %105 : vector<16x128xbf16> to vector<16x128xf32>
    %c21 = arith.constant 21 : index
    %107 = arith.index_cast %4 : i32 to index
    %c0_31 = arith.constant 0 : index
    %108 = vector.load %arg2[%c21, %107, %c0_31] : memref<22x16x128xbf16, #tpu.memory_space<vmem>>, vector<1x16x128xbf16>
    %109 = vector.shape_cast %108 : vector<1x16x128xbf16> to vector<16x128xbf16>
    %110 = arith.extf %109 : vector<16x128xbf16> to vector<16x128xf32>
    %111 = arith.maximumf %82, %86 : vector<16x128xf32>
    %112 = arith.maximumf %111, %90 : vector<16x128xf32>
    %113 = arith.maximumf %112, %94 : vector<16x128xf32>
    %114 = arith.subf %82, %113 : vector<16x128xf32>
    %115 = math.exp %114 : vector<16x128xf32>
    %116 = arith.subf %86, %113 : vector<16x128xf32>
    %117 = math.exp %116 : vector<16x128xf32>
    %118 = arith.addf %115, %117 : vector<16x128xf32>
    %119 = arith.subf %90, %113 : vector<16x128xf32>
    %120 = math.exp %119 : vector<16x128xf32>
    %121 = arith.addf %118, %120 : vector<16x128xf32>
    %122 = arith.subf %94, %113 : vector<16x128xf32>
    %123 = math.exp %122 : vector<16x128xf32>
    %124 = arith.addf %121, %123 : vector<16x128xf32>
    %125 = arith.addf %16, %113 : vector<16x128xf32>
    %126 = arith.addf %20, %82 : vector<16x128xf32>
    %127 = arith.maximumf %125, %126 : vector<16x128xf32>
    %128 = arith.subf %125, %127 : vector<16x128xf32>
    %129 = math.exp %128 : vector<16x128xf32>
    %130 = arith.mulf %129, %124 : vector<16x128xf32>
    %131 = arith.subf %126, %127 : vector<16x128xf32>
    %132 = math.exp %131 : vector<16x128xf32>
    %133 = arith.addf %130, %132 : vector<16x128xf32>
    %134 = math.log %133 : vector<16x128xf32>
    %135 = arith.addf %127, %134 : vector<16x128xf32>
    %136 = arith.addf %86, %20 : vector<16x128xf32>
    %137 = arith.addf %90, %20 : vector<16x128xf32>
    %138 = arith.addf %94, %20 : vector<16x128xf32>
    %139 = arith.maximumf %98, %102 : vector<16x128xf32>
    %140 = arith.maximumf %139, %106 : vector<16x128xf32>
    %141 = arith.maximumf %140, %110 : vector<16x128xf32>
    %142 = arith.subf %98, %141 : vector<16x128xf32>
    %143 = math.exp %142 : vector<16x128xf32>
    %144 = arith.subf %102, %141 : vector<16x128xf32>
    %145 = math.exp %144 : vector<16x128xf32>
    %146 = arith.addf %143, %145 : vector<16x128xf32>
    %147 = arith.subf %106, %141 : vector<16x128xf32>
    %148 = math.exp %147 : vector<16x128xf32>
    %149 = arith.addf %146, %148 : vector<16x128xf32>
    %150 = arith.subf %110, %141 : vector<16x128xf32>
    %151 = math.exp %150 : vector<16x128xf32>
    %152 = arith.addf %149, %151 : vector<16x128xf32>
    %153 = arith.addf %24, %141 : vector<16x128xf32>
    %154 = arith.addf %28, %98 : vector<16x128xf32>
    %155 = arith.maximumf %153, %154 : vector<16x128xf32>
    %156 = arith.subf %153, %155 : vector<16x128xf32>
    %157 = math.exp %156 : vector<16x128xf32>
    %158 = arith.mulf %157, %152 : vector<16x128xf32>
    %159 = arith.subf %154, %155 : vector<16x128xf32>
    %160 = math.exp %159 : vector<16x128xf32>
    %161 = arith.addf %158, %160 : vector<16x128xf32>
    %162 = math.log %161 : vector<16x128xf32>
    %163 = arith.addf %155, %162 : vector<16x128xf32>
    %164 = arith.addf %102, %28 : vector<16x128xf32>
    %165 = arith.addf %106, %28 : vector<16x128xf32>
    %166 = arith.addf %110, %28 : vector<16x128xf32>
    %cst = arith.constant 5.000000e-01 : f32
    %167 = vector.broadcast %cst : f32 to vector<16x128xf32>
    %168 = arith.mulf %135, %167 : vector<16x128xf32>
    %cst_32 = arith.constant 5.000000e-01 : f32
    %169 = vector.broadcast %cst_32 : f32 to vector<16x128xf32>
    %170 = arith.mulf %136, %169 : vector<16x128xf32>
    %cst_33 = arith.constant 5.000000e-01 : f32
    %171 = vector.broadcast %cst_33 : f32 to vector<16x128xf32>
    %172 = arith.mulf %137, %171 : vector<16x128xf32>
    %cst_34 = arith.constant 5.000000e-01 : f32
    %173 = vector.broadcast %cst_34 : f32 to vector<16x128xf32>
    %174 = arith.mulf %138, %173 : vector<16x128xf32>
    %cst_35 = arith.constant 5.000000e-01 : f32
    %175 = vector.broadcast %cst_35 : f32 to vector<16x128xf32>
    %176 = arith.mulf %163, %175 : vector<16x128xf32>
    %cst_36 = arith.constant 5.000000e-01 : f32
    %177 = vector.broadcast %cst_36 : f32 to vector<16x128xf32>
    %178 = arith.mulf %164, %177 : vector<16x128xf32>
    %cst_37 = arith.constant 5.000000e-01 : f32
    %179 = vector.broadcast %cst_37 : f32 to vector<16x128xf32>
    %180 = arith.mulf %165, %179 : vector<16x128xf32>
    %cst_38 = arith.constant 5.000000e-01 : f32
    %181 = vector.broadcast %cst_38 : f32 to vector<16x128xf32>
    %182 = arith.mulf %166, %181 : vector<16x128xf32>
    %183 = arith.maximumf %168, %170 : vector<16x128xf32>
    %184 = arith.maximumf %176, %178 : vector<16x128xf32>
    %185 = arith.maximumf %183, %172 : vector<16x128xf32>
    %186 = arith.maximumf %184, %180 : vector<16x128xf32>
    %187 = arith.maximumf %185, %174 : vector<16x128xf32>
    %188 = arith.maximumf %186, %182 : vector<16x128xf32>
    %189 = arith.subf %168, %187 : vector<16x128xf32>
    %190 = math.exp %189 : vector<16x128xf32>
    %191 = arith.subf %176, %188 : vector<16x128xf32>
    %192 = math.exp %191 : vector<16x128xf32>
    %193 = arith.mulf %190, %176 : vector<16x128xf32>
    %194 = arith.subf %170, %187 : vector<16x128xf32>
    %195 = math.exp %194 : vector<16x128xf32>
    %196 = arith.subf %178, %188 : vector<16x128xf32>
    %197 = math.exp %196 : vector<16x128xf32>
    %198 = arith.mulf %195, %178 : vector<16x128xf32>
    %199 = arith.addf %190, %195 : vector<16x128xf32>
    %200 = arith.addf %192, %197 : vector<16x128xf32>
    %201 = arith.addf %193, %198 : vector<16x128xf32>
    %202 = arith.subf %172, %187 : vector<16x128xf32>
    %203 = math.exp %202 : vector<16x128xf32>
    %204 = arith.subf %180, %188 : vector<16x128xf32>
    %205 = math.exp %204 : vector<16x128xf32>
    %206 = arith.mulf %203, %180 : vector<16x128xf32>
    %207 = arith.addf %199, %203 : vector<16x128xf32>
    %208 = arith.addf %200, %205 : vector<16x128xf32>
    %209 = arith.addf %201, %206 : vector<16x128xf32>
    %210 = arith.subf %174, %187 : vector<16x128xf32>
    %211 = math.exp %210 : vector<16x128xf32>
    %212 = arith.subf %182, %188 : vector<16x128xf32>
    %213 = math.exp %212 : vector<16x128xf32>
    %214 = arith.mulf %211, %182 : vector<16x128xf32>
    %215 = arith.addf %207, %211 : vector<16x128xf32>
    %216 = arith.addf %208, %213 : vector<16x128xf32>
    %217 = arith.addf %209, %214 : vector<16x128xf32>
    %218 = tpu.reciprocal %215 {approx = true} : vector<16x128xf32> -> vector<16x128xf32>
    %219 = arith.mulf %215, %218 : vector<16x128xf32>
    %cst_39 = arith.constant 2.000000e+00 : f32
    %220 = vector.broadcast %cst_39 : f32 to vector<16x128xf32>
    %221 = arith.subf %220, %219 : vector<16x128xf32>
    %222 = arith.mulf %218, %221 : vector<16x128xf32>
    %223 = math.log %216 : vector<16x128xf32>
    %224 = arith.addf %188, %223 : vector<16x128xf32>
    %225 = arith.mulf %217, %222 : vector<16x128xf32>
    %226 = arith.subf %224, %225 : vector<16x128xf32>
    %227 = arith.addf %8, %12 : vector<16x128xf32>
    %cst_40 = arith.constant 0.000000e+00 : f32
    %228 = vector.broadcast %cst_40 : f32 to vector<16x128xf32>
    %229 = arith.cmpf ogt, %227, %228 : vector<16x128xf32>
    %cst_41 = arith.constant 1.000000e+00 : f32
    %cst_42 = arith.constant 0.000000e+00 : f32
    %230 = vector.broadcast %cst_41 : f32 to vector<16x128xf32>
    %231 = vector.broadcast %cst_42 : f32 to vector<16x128xf32>
    %232 = arith.select %229, %230, %231 : vector<16x128xi1>, vector<16x128xf32>
    %c0_43 = arith.constant 0 : index
    %c0_44 = arith.constant 0 : index
    %233 = vector.load %arg7[%c0_43, %c0_44] : memref<16x128xf32, #tpu.memory_space<vmem>>, vector<16x128xf32>
    %234 = arith.mulf %232, %226 : vector<16x128xf32>
    %235 = arith.addf %233, %234 : vector<16x128xf32>
    %c0_45 = arith.constant 0 : index
    %c0_46 = arith.constant 0 : index
    %236 = vector.load %arg7[%c0_45, %c0_46] : memref<16x128xf32, #tpu.memory_space<vmem>>, vector<16x128xf32>
    tpu.vector_store %arg7[%c0_45, %c0_46], %235 {strides = array<i32>} : memref<16x128xf32, #tpu.memory_space<vmem>>, vector<16x128xf32>,
    %c1_i32 = arith.constant 1 : i32
    %c0_i32_47 = arith.constant 0 : i32
    %237 = arith.cmpi eq, %arg1, %c0_i32_47 : i32
    %238 = arith.extui %237 : i1 to i32
    %c0_i32_48 = arith.constant 0 : i32
    %239 = arith.cmpi ne, %238, %c0_i32_48 : i32
    scf.if %239 {
      %c0_49 = arith.constant 0 : index
      %c0_50 = arith.constant 0 : index
      %240 = vector.load %arg6[%c0_49, %c0_50] : memref<16x128xf32, #tpu.memory_space<vmem>>, vector<16x128xf32>
      %241 = vector.shape_cast %240 : vector<16x128xf32> to vector<1x16x128xf32>
      %cst_51 = arith.constant dense<0.000000e+00> : vector<1xf32>
      %242 = vector.multi_reduction <add>, %241, %cst_51 [1, 2] : vector<1x16x128xf32> to vector<1xf32>
      %243 = vector.shape_cast %242 : vector<1xf32> to vector<1x1x1xf32>
      %244 = vector.extract %243[0, 0, 0] : f32 from vector<1x1x1xf32>
      %245 = vector.broadcast %244 : f32 to vector<1x1xf32>
      %c0_52 = arith.constant 0 : index
      %c0_53 = arith.constant 0 : index
      %c0_54 = arith.constant 0 : index
      %246 = vector.load %arg3[%c0_52, %c0_53, %c0_54] : memref<1x1x1xf32, #tpu.memory_space<vmem>>, vector<1x1x1xf32>
      %247 = vector.shape_cast %246 : vector<1x1x1xf32> to vector<1x1xf32>
      %248 = vector.shape_cast %245 : vector<1x1xf32> to vector<1x1x1xf32>
      tpu.vector_store %arg3[%c0_52, %c0_53, %c0_54], %248 {strides = array<i32>} : memref<1x1x1xf32, #tpu.memory_space<vmem>>, vector<1x1x1xf32>,
      %c0_55 = arith.constant 0 : index
      %c0_56 = arith.constant 0 : index
      %249 = vector.load %arg7[%c0_55, %c0_56] : memref<16x128xf32, #tpu.memory_space<vmem>>, vector<16x128xf32>
      %250 = vector.shape_cast %249 : vector<16x128xf32> to vector<1x16x128xf32>
      %cst_57 = arith.constant dense<0.000000e+00> : vector<1xf32>
      %251 = vector.multi_reduction <add>, %250, %cst_57 [1, 2] : vector<1x16x128xf32> to vector<1xf32>
      %252 = vector.shape_cast %251 : vector<1xf32> to vector<1x1x1xf32>
      %253 = vector.extract %252[0, 0, 0] : f32 from vector<1x1x1xf32>
      %254 = vector.broadcast %253 : f32 to vector<1x1xf32>
      %c0_58 = arith.constant 0 : index
      %c0_59 = arith.constant 0 : index
      %c0_60 = arith.constant 0 : index
      %255 = vector.load %arg4[%c0_58, %c0_59, %c0_60] : memref<1x1x1xf32, #tpu.memory_space<vmem>>, vector<1x1x1xf32>
      %256 = vector.shape_cast %255 : vector<1x1x1xf32> to vector<1x1xf32>
      %257 = vector.shape_cast %254 : vector<1x1xf32> to vector<1x1x1xf32>
      tpu.vector_store %arg4[%c0_58, %c0_59, %c0_60], %257 {strides = array<i32>} : memref<1x1x1xf32, #tpu.memory_space<vmem>>, vector<1x1x1xf32>,
      %c0_61 = arith.constant 0 : index
      %c0_62 = arith.constant 0 : index
      %258 = vector.load %arg8[%c0_61, %c0_62] : memref<16x128xf32, #tpu.memory_space<vmem>>, vector<16x128xf32>
      %259 = vector.shape_cast %258 : vector<16x128xf32> to vector<1x16x128xf32>
      %cst_63 = arith.constant dense<0.000000e+00> : vector<1xf32>
      %260 = vector.multi_reduction <add>, %259, %cst_63 [1, 2] : vector<1x16x128xf32> to vector<1xf32>
      %261 = vector.shape_cast %260 : vector<1xf32> to vector<1x1x1xf32>
      %262 = vector.extract %261[0, 0, 0] : f32 from vector<1x1x1xf32>
      %263 = vector.broadcast %262 : f32 to vector<1x1xf32>
      %c0_64 = arith.constant 0 : index
      %c0_65 = arith.constant 0 : index
      %c0_66 = arith.constant 0 : index
      %264 = vector.load %arg5[%c0_64, %c0_65, %c0_66] : memref<1x1x1xf32, #tpu.memory_space<vmem>>, vector<1x1x1xf32>
      %265 = vector.shape_cast %264 : vector<1x1x1xf32> to vector<1x1xf32>
      %266 = vector.shape_cast %263 : vector<1x1xf32> to vector<1x1x1xf32>
      tpu.vector_store %arg5[%c0_64, %c0_65, %c0_66], %266 {strides = array<i32>} : memref<1x1x1xf32, #tpu.memory_space<vmem>>, vector<1x1x1xf32>,
    } else {
    }
    return
  }
  func.func @transform_0(%arg0: i32, %arg1: i32) -> (i32, i32, i32) {
    %c1_i32 = arith.constant 1 : i32
    %0 = arith.muli %arg0, %c1_i32 : i32
    %1 = arith.addi %0, %arg1 : i32
    %c0_i32 = arith.constant 0 : i32
    %c0_i32_0 = arith.constant 0 : i32
    %c0_i32_1 = arith.constant 0 : i32
    return %c0_i32, %1, %c0_i32_0 : i32, i32, i32
  }
  func.func @transform_1(%arg0: i32, %arg1: i32) -> (i32, i32, i32) {
    %c0_i32 = arith.constant 0 : i32
    %c0_i32_0 = arith.constant 0 : i32
    %c0_i32_1 = arith.constant 0 : i32
    return %arg0, %c0_i32, %c0_i32_0 : i32, i32, i32
  }
  func.func @transform_2(%arg0: i32, %arg1: i32) -> (i32, i32, i32) {
    %c0_i32 = arith.constant 0 : i32
    %c0_i32_0 = arith.constant 0 : i32
    %c0_i32_1 = arith.constant 0 : i32
    return %arg0, %c0_i32, %c0_i32_0 : i32, i32, i32
  }
  func.func @transform_3(%arg0: i32, %arg1: i32) -> (i32, i32, i32) {
    %c0_i32 = arith.constant 0 : i32
    %c0_i32_0 = arith.constant 0 : i32
    %c0_i32_1 = arith.constant 0 : i32
    return %arg0, %c0_i32, %c0_i32_0 : i32, i32, i32
  }
}

</mosaic_0001>

<llo_original>
// kernel: kd_loss_pallas.1
$region0: #{kd_loss_pallas.1}
  #allocation0 [shape = 'u32[]', space=smem, size = 0x4, offset = 0x4, fixed_abs, tag = 'smem constant byte address 0x4 - core index']
  #allocation1 [shape = 'u32[72,128]{1,0:T(1,128)}', space=vmem, size = 0x9000, scoped, tag = 'internal scratch']
  #allocation2 [shape = 'f32[16,128]{1,0:T(8,128)}', space=vmem, size = 0x2000, scoped, tag = 'scratch operand']
  #allocation3 [shape = 'f32[16,128]{1,0:T(8,128)}', space=vmem, size = 0x2000, scoped, tag = 'scratch operand']
  #allocation4 [shape = 'f32[16,128]{1,0:T(8,128)}', space=vmem, size = 0x2000, scoped, tag = 'scratch operand']
  %s0 = inlined_call_operand.vmem [shape: bf16[22,16,128], index: 0, kind: input, shape index: {}]
  %s1 = inlined_call_operand.hbm [shape: f32[1,1,1], index: 1, kind: output, shape index: {0}]
  %s2 = inlined_call_operand.hbm [shape: f32[1,1,1], index: 2, kind: output, shape index: {1}]
  %s3 = inlined_call_operand.hbm [shape: f32[1,1,1], index: 3, kind: output, shape index: {2}]
  %4 = xla_tuple %s1, %s2, %s3
  %s5 = sld [smem:[#allocation0]]
  $region38: #{kd_loss_pallas.1} parent=0
    _
  %s7 = ssub.s32 1, %s5
  %s8 = scalar_select 0, %s7, %s5
  $region1: #{kd_loss_pallas.1} parent=0
    #allocation5 [shape = 'u8[512]{0}', space=vmem, size = 0x400, scoped, tag = 'output window, operand 0, single buffered']
    #allocation6 [shape = 's32[1]{0}', space=sflag, size = 0x4, scoped, tag = 'scoped memory for kd_loss_pallas.1']
    #allocation7 [shape = 'u8[512]{0}', space=vmem, size = 0x400, scoped, tag = 'output window, operand 1, single buffered']
    #allocation8 [shape = 's32[1]{0}', space=sflag, size = 0x4, scoped, tag = 'scoped memory for kd_loss_pallas.1']
    #allocation9 [shape = 'u8[512]{0}', space=vmem, size = 0x400, scoped, tag = 'output window, operand 2, single buffered']
    %9 = vsyncpa [#allocation6], 0
    %10 = vsyncpa [#allocation8], 0
    // Predicated region
    $region2: #{kd_loss_pallas.1} parent=1 // pred_check
      _
    $region3: #{kd_loss_pallas.1} parent=1 // pred_check_branch
      %12 = sbr.rel (0) target = $region5
    $region4: #{kd_loss_pallas.1} parent=1 // pred_region
      %s13 = sadd.s32 0, 0
      %s14 = smul.u32 2, %s13
      %p15 = scmp.lt.s32.totalorder %s14, 1
      %s16 = scalar_select %p15, %s14, 1
      %s17 = smul.addr %s16, 4
      %s18 = scalar_lea.vmem %s0, %s17
      %s19 = sadd.s32 0, 0
      %s20 = smul.u32 2, %s19
    $region5: #{kd_loss_pallas.1} parent=1 // pred_fallthru
      _
    %s21 = sadd.s32 0, 0
    %s22 = smul.u32 2, %s21
    %p23 = scmp.lt.s32.totalorder %s22, 1
    %s24 = scalar_select %p23, %s22, 1
    %s25 = smul.addr %s24, 4
    %s26 = scalar_lea.vmem %s0, %s25
    %s27 = sadd.s32 0, 0
    %s28 = smul.u32 2, %s27
    %p29 = scmp.lt.s32.totalorder %s28, 1
    %s30 = scalar_select %p29, %s28, 1
    %s31 = smul.addr %s30, 4
    %s32 = scalar_lea.vmem %s0, %s31
    %s33 = sadd.s32 0, 0
    %s34 = smul.u32 2, %s33
    %p35 = scmp.eq.s32.totalorder 0, 0
    // Predicated region
    $region6: #{kd_loss_pallas.1} parent=1 // pred_check
      %p36 = pneg %p35
    $region7: #{kd_loss_pallas.1} parent=1 // pred_check_branch
      %38 = sbr.rel (%p36) target = $region9
    $region8: #{kd_loss_pallas.1} parent=1 // pred_region
      %39 = vst [vmem:[#allocation2] sm:$0xff] 0.0
      %40 = vst [vmem:[#allocation2 + $0x8] sm:$0xff] 0.0
      %41 = vst [vmem:[#allocation3] sm:$0xff] 0.0
      %42 = vst [vmem:[#allocation3 + $0x8] sm:$0xff] 0.0
      %43 = vst [vmem:[#allocation4] sm:$0xff] 0.0
      %44 = vst [vmem:[#allocation4 + $0x8] sm:$0xff] 0.0
    $region9: #{kd_loss_pallas.1} parent=1 // pred_fallthru
      _
    %v45 = vld [vmem:[%s32] sm:$0xf]
    %v46 = vld [vmem:[%s32 + $0x4] sm:$0xf]
    %v47 = vunpack.c.l.bf16 %v45
    %v48 = vunpack.c.l.bf16 %v46
    %s49 = sadd.s32 0, 2
    %s50 = smul.addr %s49, 4
    %s51 = scalar_lea.vmem %s32, %s50
    %v52 = vld [vmem:[%s51] sm:$0xf]
    %v53 = vld [vmem:[%s51 + $0x4] sm:$0xf]
    %v54 = vunpack.c.l.bf16 %v52
    %v55 = vunpack.c.l.bf16 %v53
    %s56 = sadd.s32 0, 4
    %s57 = smul.addr %s56, 4
    %s58 = scalar_lea.vmem %s32, %s57
    %v59 = vld [vmem:[%s58] sm:$0xf]
    %v60 = vld [vmem:[%s58 + $0x4] sm:$0xf]
    %v61 = vunpack.c.l.bf16 %v59
    %v62 = vunpack.c.l.bf16 %v60
    %s63 = sadd.s32 0, 6
    %s64 = smul.addr %s63, 4
    %s65 = scalar_lea.vmem %s32, %s64
    %v66 = vld [vmem:[%s65] sm:$0xf]
    %v67 = vld [vmem:[%s65 + $0x4] sm:$0xf]
    %v68 = vunpack.c.l.bf16 %v66
    %v69 = vunpack.c.l.bf16 %v67
    %s70 = sadd.s32 0, 8
    %s71 = smul.addr %s70, 4
    %s72 = scalar_lea.vmem %s32, %s71
    %v73 = vld [vmem:[%s72] sm:$0xf]
    %v74 = vld [vmem:[%s72 + $0x4] sm:$0xf]
    %v75 = vunpack.c.l.bf16 %v73
    %v76 = vunpack.c.l.bf16 %v74
    %s77 = sadd.s32 0, 10
    %s78 = smul.addr %s77, 4
    %s79 = scalar_lea.vmem %s32, %s78
    %v80 = vld [vmem:[%s79] sm:$0xf]
    %v81 = vld [vmem:[%s79 + $0x4] sm:$0xf]
    %v82 = vunpack.c.l.bf16 %v80
    %v83 = vunpack.c.l.bf16 %v81
    %s84 = sadd.s32 0, 12
    %s85 = smul.addr %s84, 4
    %s86 = scalar_lea.vmem %s32, %s85
    %v87 = vld [vmem:[%s86] sm:$0xf]
    %v88 = vld [vmem:[%s86 + $0x4] sm:$0xf]
    %v89 = vunpack.c.l.bf16 %v87
    %v90 = vunpack.c.l.bf16 %v88
    %s91 = sadd.s32 0, 20
    %s92 = smul.addr %s91, 4
    %s93 = scalar_lea.vmem %s32, %s92
    %v94 = vld [vmem:[%s93] sm:$0xf]
    %v95 = vld [vmem:[%s93 + $0x4] sm:$0xf]
    %v96 = vunpack.c.l.bf16 %v94
    %v97 = vunpack.c.l.bf16 %v95
    %v98 = vsub.f32 %v89, %v96
    %v99 = vsub.f32 %v90, %v97
    %v100 = vmul.f32 %v98, %v98
    %v101 = vmul.f32 %v99, %v99
    %s102 = sadd.s32 0, 14
    %s103 = smul.addr %s102, 4
    %s104 = scalar_lea.vmem %s32, %s103
    %v105 = vld [vmem:[%s104] sm:$0xf]
    %v106 = vld [vmem:[%s104 + $0x4] sm:$0xf]
    %v107 = vunpack.c.l.bf16 %v105
    %v108 = vunpack.c.l.bf16 %v106
    %s109 = sadd.s32 0, 22
    %s110 = smul.addr %s109, 4
    %s111 = scalar_lea.vmem %s32, %s110
    %v112 = vld [vmem:[%s111] sm:$0xf]
    %v113 = vld [vmem:[%s111 + $0x4] sm:$0xf]
    %v114 = vunpack.c.l.bf16 %v112
    %v115 = vunpack.c.l.bf16 %v113
    %v116 = vsub.f32 %v107, %v114
    %v117 = vsub.f32 %v108, %v115
    %v118 = vmul.f32 %v116, %v116
    %v119 = vmul.f32 %v117, %v117
    %v120 = vadd.f32 %v100, %v118
    %v121 = vadd.f32 %v101, %v119
    %s122 = sadd.s32 0, 16
    %s123 = smul.addr %s122, 4
    %s124 = scalar_lea.vmem %s32, %s123
    %v125 = vld [vmem:[%s124] sm:$0xf]
    %v126 = vld [vmem:[%s124 + $0x4] sm:$0xf]
    %v127 = vunpack.c.l.bf16 %v125
    %v128 = vunpack.c.l.bf16 %v126
    %s129 = sadd.s32 0, 24
    %s130 = smul.addr %s129, 4
    %s131 = scalar_lea.vmem %s32, %s130
    %v132 = vld [vmem:[%s131] sm:$0xf]
    %v133 = vld [vmem:[%s131 + $0x4] sm:$0xf]
    %v134 = vunpack.c.l.bf16 %v132
    %v135 = vunpack.c.l.bf16 %v133
    %v136 = vsub.f32 %v127, %v134
    %v137 = vsub.f32 %v128, %v135
    %v138 = vmul.f32 %v136, %v136
    %v139 = vmul.f32 %v137, %v137
    %v140 = vadd.f32 %v120, %v138
    %v141 = vadd.f32 %v121, %v139
    %s142 = sadd.s32 0, 18
    %s143 = smul.addr %s142, 4
    %s144 = scalar_lea.vmem %s32, %s143
    %v145 = vld [vmem:[%s144] sm:$0xf]
    %v146 = vld [vmem:[%s144 + $0x4] sm:$0xf]
    %v147 = vunpack.c.l.bf16 %v145
    %v148 = vunpack.c.l.bf16 %v146
    %s149 = sadd.s32 0, 26
    %s150 = smul.addr %s149, 4
    %s151 = scalar_lea.vmem %s32, %s150
    %v152 = vld [vmem:[%s151] sm:$0xf]
    %v153 = vld [vmem:[%s151 + $0x4] sm:$0xf]
    %v154 = vunpack.c.l.bf16 %v152
    %v155 = vunpack.c.l.bf16 %v153
    %v156 = vsub.f32 %v147, %v154
    %v157 = vsub.f32 %v148, %v155
    %v158 = vmul.f32 %v156, %v156
    %v159 = vmul.f32 %v157, %v157
    %v160 = vadd.f32 %v140, %v158
    %v161 = vadd.f32 %v141, %v159
    %v162 = vld [vmem:[#allocation2] sm:$0xff]
    %v163 = vld [vmem:[#allocation2 + $0x8] sm:$0xff]
    %v164 = vmul.f32 %v47, %v160
    %v165 = vmul.f32 %v48, %v161
    %v166 = vadd.f32 %v162, %v164
    %v167 = vadd.f32 %v163, %v165
    %168 = vst [vmem:[#allocation2] sm:$0xff] %v166
    %169 = vst [vmem:[#allocation2 + $0x8] sm:$0xff] %v167
    %v170 = vld [vmem:[#allocation4] sm:$0xff]
    %v171 = vld [vmem:[#allocation4 + $0x8] sm:$0xff]
    %v172 = vadd.f32 %v170, %v47
    %v173 = vadd.f32 %v171, %v48
    %174 = vst [vmem:[#allocation4] sm:$0xff] %v172
    %175 = vst [vmem:[#allocation4 + $0x8] sm:$0xff] %v173
    %s176 = sadd.s32 0, 28
    %s177 = smul.addr %s176, 4
    %s178 = scalar_lea.vmem %s32, %s177
    %v179 = vld [vmem:[%s178] sm:$0xf]
    %v180 = vld [vmem:[%s178 + $0x4] sm:$0xf]
    %v181 = vunpack.c.l.bf16 %v179
    %v182 = vunpack.c.l.bf16 %v180
    %s183 = sadd.s32 0, 30
    %s184 = smul.addr %s183, 4
    %s185 = scalar_lea.vmem %s32, %s184
    %v186 = vld [vmem:[%s185] sm:$0xf]
    %v187 = vld [vmem:[%s185 + $0x4] sm:$0xf]
    %v188 = vunpack.c.l.bf16 %v186
    %v189 = vunpack.c.l.bf16 %v187
    %s190 = sadd.s32 0, 32
    %s191 = smul.addr %s190, 4
    %s192 = scalar_lea.vmem %s32, %s191
    %v193 = vld [vmem:[%s192] sm:$0xf]
    %v194 = vld [vmem:[%s192 + $0x4] sm:$0xf]
    %v195 = vunpack.c.l.bf16 %v193
    %v196 = vunpack.c.l.bf16 %v194
    %s197 = sadd.s32 0, 34
    %s198 = smul.addr %s197, 4
    %s199 = scalar_lea.vmem %s32, %s198
    %v200 = vld [vmem:[%s199] sm:$0xf]
    %v201 = vld [vmem:[%s199 + $0x4] sm:$0xf]
    %v202 = vunpack.c.l.bf16 %v200
    %v203 = vunpack.c.l.bf16 %v201
    %s204 = sadd.s32 0, 36
    %s205 = smul.addr %s204, 4
    %s206 = scalar_lea.vmem %s32, %s205
    %v207 = vld [vmem:[%s206] sm:$0xf]
    %v208 = vld [vmem:[%s206 + $0x4] sm:$0xf]
    %v209 = vunpack.c.l.bf16 %v207
    %v210 = vunpack.c.l.bf16 %v208
    %s211 = sadd.s32 0, 38
    %s212 = smul.addr %s211, 4
    %s213 = scalar_lea.vmem %s32, %s212
    %v214 = vld [vmem:[%s213] sm:$0xf]
    %v215 = vld [vmem:[%s213 + $0x4] sm:$0xf]
    %v216 = vunpack.c.l.bf16 %v214
    %v217 = vunpack.c.l.bf16 %v215
    %s218 = sadd.s32 0, 40
    %s219 = smul.addr %s218, 4
    %s220 = scalar_lea.vmem %s32, %s219
    %v221 = vld [vmem:[%s220] sm:$0xf]
    %v222 = vld [vmem:[%s220 + $0x4] sm:$0xf]
    %v223 = vunpack.c.l.bf16 %v221
    %v224 = vunpack.c.l.bf16 %v222
    %s225 = sadd.s32 0, 42
    %s226 = smul.addr %s225, 4
    %s227 = scalar_lea.vmem %s32, %s226
    %v228 = vld [vmem:[%s227] sm:$0xf]
    %v229 = vld [vmem:[%s227 + $0x4] sm:$0xf]
    %v230 = vunpack.c.l.bf16 %v228
    %v231 = vunpack.c.l.bf16 %v229
    %v232 = vmax.f32 %v181, %v188
    %v233 = vmax.f32 %v182, %v189
    %v234 = vmax.f32 %v232, %v195
    %v235 = vmax.f32 %v233, %v196
    %v236 = vmax.f32 %v234, %v202
    %v237 = vmax.f32 %v235, %v203
    %v238 = vsub.f32 %v181, %v236
    %v239 = vsub.f32 %v182, %v237
    %v240 = vmul.f32 %v238, 1.442695
    %v241 = vpow.pop %v240
    %v242 = vmul.f32 %v239, 1.442695
    %v243 = vpow.pop %v242
    %v244 = vsub.f32 %v188, %v236
    %v245 = vsub.f32 %v189, %v237
    %v246 = vmul.f32 %v244, 1.442695
    %v247 = vpow.pop %v246
    %v248 = vmul.f32 %v245, 1.442695
    %v249 = vpow.pop %v248
    %v250 = vadd.f32 %v241, %v247
    %v251 = vadd.f32 %v243, %v249
    %v252 = vsub.f32 %v195, %v236
    %v253 = vsub.f32 %v196, %v237
    %v254 = vmul.f32 %v252, 1.442695
    %v255 = vpow.pop %v254
    %v256 = vmul.f32 %v253, 1.442695
    %v257 = vpow.pop %v256
    %v258 = vadd.f32 %v250, %v255
    %v259 = vadd.f32 %v251, %v257
    %v260 = vsub.f32 %v202, %v236
    %v261 = vsub.f32 %v203, %v237
    %v262 = vmul.f32 %v260, 1.442695
    %v263 = vpow.pop %v262
    %v264 = vmul.f32 %v261, 1.442695
    %v265 = vpow.pop %v264
    %v266 = vadd.f32 %v258, %v263
    %v267 = vadd.f32 %v259, %v265
    %v268 = vadd.f32 %v61, %v236
    %v269 = vadd.f32 %v62, %v237
    %v270 = vadd.f32 %v68, %v181
    %v271 = vadd.f32 %v69, %v182
    %v272 = vmax.f32 %v268, %v270
    %v273 = vmax.f32 %v269, %v271
    %v274 = vsub.f32 %v268, %v272
    %v275 = vsub.f32 %v269, %v273
    %v276 = vmul.f32 %v274, 1.442695
    %v277 = vpow.pop %v276
    %v278 = vmul.f32 %v275, 1.442695
    %v279 = vpow.pop %v278
    %v280 = vmul.f32 %v277, %v266
    %v281 = vmul.f32 %v279, %v267
    %v282 = vsub.f32 %v270, %v272
    %v283 = vsub.f32 %v271, %v273
    %v284 = vmul.f32 %v282, 1.442695
    %v285 = vpow.pop %v284
    %v286 = vmul.f32 %v283, 1.442695
    %v287 = vpow.pop %v286
    %v288 = vadd.f32 %v280, %v285
    %v289 = vadd.f32 %v281, %v287
    %v290 = vlog2.pop %v288
    %v291 = vmul.f32 %v290, 0.6931472
    %v292 = vlog2.pop %v289
    %v293 = vmul.f32 %v292, 0.6931472
    %v294 = vadd.f32 %v272, %v291
    %v295 = vadd.f32 %v273, %v293
    %v296 = vadd.f32 %v188, %v68
    %v297 = vadd.f32 %v189, %v69
    %v298 = vadd.f32 %v195, %v68
    %v299 = vadd.f32 %v196, %v69
    %v300 = vadd.f32 %v202, %v68
    %v301 = vadd.f32 %v203, %v69
    %v302 = vmax.f32 %v209, %v216
    %v303 = vmax.f32 %v210, %v217
    %v304 = vmax.f32 %v302, %v223
    %v305 = vmax.f32 %v303, %v224
    %v306 = vmax.f32 %v304, %v230
    %v307 = vmax.f32 %v305, %v231
    %v308 = vsub.f32 %v209, %v306
    %v309 = vsub.f32 %v210, %v307
    %v310 = vmul.f32 %v308, 1.442695
    %v311 = vpow.pop %v310
    %v312 = vmul.f32 %v309, 1.442695
    %v313 = vpow.pop %v312
    %v314 = vsub.f32 %v216, %v306
    %v315 = vsub.f32 %v217, %v307
    %v316 = vmul.f32 %v314, 1.442695
    %v317 = vpow.pop %v316
    %v318 = vmul.f32 %v315, 1.442695
    %v319 = vpow.pop %v318
    %v320 = vadd.f32 %v311, %v317
    %v321 = vadd.f32 %v313, %v319
    %v322 = vsub.f32 %v223, %v306
    %v323 = vsub.f32 %v224, %v307
    %v324 = vmul.f32 %v322, 1.442695
    %v325 = vpow.pop %v324
    %v326 = vmul.f32 %v323, 1.442695
    %v327 = vpow.pop %v326
    %v328 = vadd.f32 %v320, %v325
    %v329 = vadd.f32 %v321, %v327
    %v330 = vsub.f32 %v230, %v306
    %v331 = vsub.f32 %v231, %v307
    %v332 = vmul.f32 %v330, 1.442695
    %v333 = vpow.pop %v332
    %v334 = vmul.f32 %v331, 1.442695
    %v335 = vpow.pop %v334
    %v336 = vadd.f32 %v328, %v333
    %v337 = vadd.f32 %v329, %v335
    %v338 = vadd.f32 %v75, %v306
    %v339 = vadd.f32 %v76, %v307
    %v340 = vadd.f32 %v82, %v209
    %v341 = vadd.f32 %v83, %v210
    %v342 = vmax.f32 %v338, %v340
    %v343 = vmax.f32 %v339, %v341
    %v344 = vsub.f32 %v338, %v342
    %v345 = vsub.f32 %v339, %v343
    %v346 = vmul.f32 %v344, 1.442695
    %v347 = vpow.pop %v346
    %v348 = vmul.f32 %v345, 1.442695
    %v349 = vpow.pop %v348
    %v350 = vmul.f32 %v347, %v336
    %v351 = vmul.f32 %v349, %v337
    %v352 = vsub.f32 %v340, %v342
    %v353 = vsub.f32 %v341, %v343
    %v354 = vmul.f32 %v352, 1.442695
    %v355 = vpow.pop %v354
    %v356 = vmul.f32 %v353, 1.442695
    %v357 = vpow.pop %v356
    %v358 = vadd.f32 %v350, %v355
    %v359 = vadd.f32 %v351, %v357
    %v360 = vlog2.pop %v358
    %v361 = vmul.f32 %v360, 0.6931472
    %v362 = vlog2.pop %v359
    %v363 = vmul.f32 %v362, 0.6931472
    %v364 = vadd.f32 %v342, %v361
    %v365 = vadd.f32 %v343, %v363
    %v366 = vadd.f32 %v216, %v82
    %v367 = vadd.f32 %v217, %v83
    %v368 = vadd.f32 %v223, %v82
    %v369 = vadd.f32 %v224, %v83
    %v370 = vadd.f32 %v230, %v82
    %v371 = vadd.f32 %v231, %v83
    %v372 = vmul.f32 %v294, 0.5
    %v373 = vmul.f32 %v295, 0.5
    %v374 = vmul.f32 %v296, 0.5
    %v375 = vmul.f32 %v297, 0.5
    %v376 = vmul.f32 %v298, 0.5
    %v377 = vmul.f32 %v299, 0.5
    %v378 = vmul.f32 %v300, 0.5
    %v379 = vmul.f32 %v301, 0.5
    %v380 = vmul.f32 %v364, 0.5
    %v381 = vmul.f32 %v365, 0.5
    %v382 = vmul.f32 %v366, 0.5
    %v383 = vmul.f32 %v367, 0.5
    %v384 = vmul.f32 %v368, 0.5
    %v385 = vmul.f32 %v369, 0.5
    %v386 = vmul.f32 %v370, 0.5
    %v387 = vmul.f32 %v371, 0.5
    %v388 = vmax.f32 %v372, %v374
    %v389 = vmax.f32 %v373, %v375
    %v390 = vmax.f32 %v380, %v382
    %v391 = vmax.f32 %v381, %v383
    %v392 = vmax.f32 %v388, %v376
    %v393 = vmax.f32 %v389, %v377
    %v394 = vmax.f32 %v390, %v384
    %v395 = vmax.f32 %v391, %v385
    %v396 = vmax.f32 %v392, %v378
    %v397 = vmax.f32 %v393, %v379
    %v398 = vmax.f32 %v394, %v386
    %v399 = vmax.f32 %v395, %v387
    %v400 = vsub.f32 %v372, %v396
    %v401 = vsub.f32 %v373, %v397
    %v402 = vmul.f32 %v400, 1.442695
    %v403 = vpow.pop %v402
    %v404 = vmul.f32 %v401, 1.442695
    %v405 = vpow.pop %v404
    %v406 = vsub.f32 %v380, %v398
    %v407 = vsub.f32 %v381, %v399
    %v408 = vmul.f32 %v406, 1.442695
    %v409 = vpow.pop %v408
    %v410 = vmul.f32 %v407, 1.442695
    %v411 = vpow.pop %v410
    %v412 = vmul.f32 %v403, %v380
    %v413 = vmul.f32 %v405, %v381
    %v414 = vsub.f32 %v374, %v396
    %v415 = vsub.f32 %v375, %v397
    %v416 = vmul.f32 %v414, 1.442695
    %v417 = vpow.pop %v416
    %v418 = vmul.f32 %v415, 1.442695
    %v419 = vpow.pop %v418
    %v420 = vsub.f32 %v382, %v398
    %v421 = vsub.f32 %v383, %v399
    %v422 = vmul.f32 %v420, 1.442695
    %v423 = vpow.pop %v422
    %v424 = vmul.f32 %v421, 1.442695
    %v425 = vpow.pop %v424
    %v426 = vmul.f32 %v417, %v382
    %v427 = vmul.f32 %v419, %v383
    %v428 = vadd.f32 %v403, %v417
    %v429 = vadd.f32 %v405, %v419
    %v430 = vadd.f32 %v409, %v423
    %v431 = vadd.f32 %v411, %v425
    %v432 = vadd.f32 %v412, %v426
    %v433 = vadd.f32 %v413, %v427
    %v434 = vsub.f32 %v376, %v396
    %v435 = vsub.f32 %v377, %v397
    %v436 = vmul.f32 %v434, 1.442695
    %v437 = vpow.pop %v436
    %v438 = vmul.f32 %v435, 1.442695
    %v439 = vpow.pop %v438
    %v440 = vsub.f32 %v384, %v398
    %v441 = vsub.f32 %v385, %v399
    %v442 = vmul.f32 %v440, 1.442695
    %v443 = vpow.pop %v442
    %v444 = vmul.f32 %v441, 1.442695
    %v445 = vpow.pop %v444
    %v446 = vmul.f32 %v437, %v384
    %v447 = vmul.f32 %v439, %v385
    %v448 = vadd.f32 %v428, %v437
    %v449 = vadd.f32 %v429, %v439
    %v450 = vadd.f32 %v430, %v443
    %v451 = vadd.f32 %v431, %v445
    %v452 = vadd.f32 %v432, %v446
    %v453 = vadd.f32 %v433, %v447
    %v454 = vsub.f32 %v378, %v396
    %v455 = vsub.f32 %v379, %v397
    %v456 = vmul.f32 %v454, 1.442695
    %v457 = vpow.pop %v456
    %v458 = vmul.f32 %v455, 1.442695
    %v459 = vpow.pop %v458
    %v460 = vsub.f32 %v386, %v398
    %v461 = vsub.f32 %v387, %v399
    %v462 = vmul.f32 %v460, 1.442695
    %v463 = vpow.pop %v462
    %v464 = vmul.f32 %v461, 1.442695
    %v465 = vpow.pop %v464
    %v466 = vmul.f32 %v457, %v386
    %v467 = vmul.f32 %v459, %v387
    %v468 = vadd.f32 %v448, %v457
    %v469 = vadd.f32 %v449, %v459
    %v470 = vadd.f32 %v450, %v463
    %v471 = vadd.f32 %v451, %v465
    %v472 = vadd.f32 %v452, %v466
    %v473 = vadd.f32 %v453, %v467
    %v474 = vrcp.pop %v468
    %v475 = vrcp.pop %v469
    %v476 = vmul.f32 %v468, %v474
    %v477 = vmul.f32 %v469, %v475
    %v478 = vsub.f32 2.0, %v476
    %v479 = vsub.f32 2.0, %v477
    %v480 = vmul.f32 %v474, %v478
    %v481 = vmul.f32 %v475, %v479
    %v482 = vlog2.pop %v470
    %v483 = vmul.f32 %v482, 0.6931472
    %v484 = vlog2.pop %v471
    %v485 = vmul.f32 %v484, 0.6931472
    %v486 = vadd.f32 %v398, %v483
    %v487 = vadd.f32 %v399, %v485
    %v488 = vmul.f32 %v472, %v480
    %v489 = vmul.f32 %v473, %v481
    %v490 = vsub.f32 %v486, %v488
    %v491 = vsub.f32 %v487, %v489
    %v492 = vadd.f32 %v47, %v54
    %v493 = vadd.f32 %v48, %v55
    %vm494 = vcmp.gt.f32.partialorder %v492, 0.0
    %vm495 = vcmp.gt.f32.partialorder %v493, 0.0
    %v496 = vsel %vm494, 1.0, 0.0
    %v497 = vsel %vm495, 1.0, 0.0
    %v498 = vld [vmem:[#allocation3] sm:$0xff]
    %v499 = vld [vmem:[#allocation3 + $0x8] sm:$0xff]
    %v500 = vmul.f32 %v496, %v490
    %v501 = vmul.f32 %v497, %v491
    %v502 = vadd.f32 %v498, %v500
    %v503 = vadd.f32 %v499, %v501
    %504 = vst [vmem:[#allocation3] sm:$0xff] %v502
    %505 = vst [vmem:[#allocation3 + $0x8] sm:$0xff] %v503
    // Predicated region
    $region10: #{kd_loss_pallas.1} parent=1 // pred_check
      %p506 = pneg %p35
    $region11: #{kd_loss_pallas.1} parent=1 // pred_check_branch
      %508 = sbr.rel (%p506) target = $region13
    $region12: #{kd_loss_pallas.1} parent=1 // pred_region
      %v509 = vld [vmem:[#allocation2] sm:$0xff]
      %v510 = vld [vmem:[#allocation2 + $0x8] sm:$0xff]
      %v511 = vadd.f32 %v509, %v510
      %512 = vadd.xlane.f32.xlu0 %v511
      %v513 = vpop.xlane.xlu0 %512
      %v514 = vrot.slane %v513, 4
      %v515 = vadd.f32 %v513, %v514
      %v516 = vrot.slane %v515, 2
      %v517 = vadd.f32 %v515, %v516
      %v518 = vrot.slane %v517, 1
      %v519 = vadd.f32 %v517, %v518
      %s520 = vtos %v519
      %v521 = vstv %s520
      %vm522 = vcmask 0
      %523 = vst.msk [vmem:[#allocation5] sm:$0x1] %vm522, %v521
      %v524 = vld [vmem:[#allocation3] sm:$0xff]
      %v525 = vld [vmem:[#allocation3 + $0x8] sm:$0xff]
      %v526 = vadd.f32 %v524, %v525
      %527 = vadd.xlane.f32.xlu0 %v526
      %v528 = vpop.xlane.xlu0 %527
      %v529 = vrot.slane %v528, 4
      %v530 = vadd.f32 %v528, %v529
      %v531 = vrot.slane %v530, 2
      %v532 = vadd.f32 %v530, %v531
      %v533 = vrot.slane %v532, 1
      %v534 = vadd.f32 %v532, %v533
      %s535 = vtos %v534
      %v536 = vstv %s535
      %537 = vst.msk [vmem:[#allocation7] sm:$0x1] %vm522, %v536
      %v538 = vld [vmem:[#allocation4] sm:$0xff]
      %v539 = vld [vmem:[#allocation4 + $0x8] sm:$0xff]
      %v540 = vadd.f32 %v538, %v539
      %541 = vadd.xlane.f32.xlu0 %v540
      %v542 = vpop.xlane.xlu0 %541
      %v543 = vrot.slane %v542, 4
      %v544 = vadd.f32 %v542, %v543
      %v545 = vrot.slane %v544, 2
      %v546 = vadd.f32 %v544, %v545
      %v547 = vrot.slane %v546, 1
      %v548 = vadd.f32 %v546, %v547
      %s549 = vtos %v548
      %v550 = vstv %s549
      %551 = vst.msk [vmem:[#allocation9] sm:$0x1] %vm522, %v550
    $region13: #{kd_loss_pallas.1} parent=1 // pred_fallthru
      _
    // Predicated region
    $region14: #{kd_loss_pallas.1} parent=1 // pred_check
      _
    $region15: #{kd_loss_pallas.1} parent=1 // pred_check_branch
      %553 = sbr.rel (0) target = $region17
    $region16: #{kd_loss_pallas.1} parent=1 // pred_region
      %555 = vsyncadd [#allocation6], 0
      %s557 = sshll.u32 [#allocation5], 4
      %s558 = int_to_ptr.vmem [resolvable:$true] %s557
      %s559 = sshll.u32 %s1, 4
      %s560 = int_to_ptr.hbm [resolvable:$true] %s559
      %562 = dma.vmem_to_hbm [thread:$0]  %s558, 16, %s560, [#allocation6]
    $region17: #{kd_loss_pallas.1} parent=1 // pred_fallthru
      _
    // Predicated region
    $region18: #{kd_loss_pallas.1} parent=1 // pred_check
      _
    $region19: #{kd_loss_pallas.1} parent=1 // pred_check_branch
      %564 = sbr.rel (0) target = $region21
    $region20: #{kd_loss_pallas.1} parent=1 // pred_region
      %566 = vsyncadd [#allocation8], 0
      %s568 = sshll.u32 [#allocation7], 4
      %s569 = int_to_ptr.vmem [resolvable:$true] %s568
      %s570 = sshll.u32 %s2, 4
      %s571 = int_to_ptr.hbm [resolvable:$true] %s570
      %573 = dma.vmem_to_hbm [thread:$0]  %s569, 16, %s571, [#allocation8]
    $region21: #{kd_loss_pallas.1} parent=1 // pred_fallthru
      _
    // Predicated region
    $region22: #{kd_loss_pallas.1} parent=1 // pred_check
      _
    $region23: #{kd_loss_pallas.1} parent=1 // pred_check_branch
      %575 = sbr.rel (0) target = $region25
    $region24: #{kd_loss_pallas.1} parent=1 // pred_region
      %577 = vsyncadd [#allocation8], 0
      %s579 = sshll.u32 [#allocation9], 4
      %s580 = int_to_ptr.vmem [resolvable:$true] %s579
      %s581 = sshll.u32 %s3, 4
      %s582 = int_to_ptr.hbm [resolvable:$true] %s581
      %584 = dma.vmem_to_hbm [thread:$0]  %s580, 16, %s582, [#allocation8]
    $region25: #{kd_loss_pallas.1} parent=1 // pred_fallthru
      _
    // Predicated region
    $region26: #{kd_loss_pallas.1} parent=1 // pred_check
      _
    $region27: #{kd_loss_pallas.1} parent=1 // pred_check_branch
      %586 = sbr.rel (0) target = $region29
    $region28: #{kd_loss_pallas.1} parent=1 // pred_region
      %588 = dma.done [#allocation6], 16
    $region29: #{kd_loss_pallas.1} parent=1 // pred_fallthru
      _
    // Predicated region
    $region30: #{kd_loss_pallas.1} parent=1 // pred_check
      _
    $region31: #{kd_loss_pallas.1} parent=1 // pred_check_branch
      %590 = sbr.rel (0) target = $region33
    $region32: #{kd_loss_pallas.1} parent=1 // pred_region
      %592 = dma.done [#allocation8], 16
    $region33: #{kd_loss_pallas.1} parent=1 // pred_fallthru
      _
    // Predicated region
    $region34: #{kd_loss_pallas.1} parent=1 // pred_check
      _
    $region35: #{kd_loss_pallas.1} parent=1 // pred_check_branch
      %594 = sbr.rel (0) target = $region37
    $region36: #{kd_loss_pallas.1} parent=1 // pred_region
      %596 = dma.done [#allocation8], 16
    $region37: #{kd_loss_pallas.1} parent=1 // pred_fallthru
      _
    %597 = vsyncpa [#allocation6], 1
    %598 = vsyncpa [#allocation8], 1

</llo_original>
